<compile_context>
chip_gen: v7x
topology: tpu7x:2x2x1
jax: 0.10.0
libtpu: 0.0.40
codegen_flags: <defaults>
</compile_context>

<pallas_src>
import functools

import jax
import jax.numpy as jnp
from jax.experimental import pallas as pl
from jax.experimental.pallas import tpu as pltpu

EPS = 1e-5  # nn.InstanceNorm2d default eps


def _vmem_capacity_bytes():
    """Physical per-core VMEM; conservative 64 MiB (v7x) fallback if the query fails."""
    try:
        info = pltpu.get_tpu_info()
        cap = int(getattr(info, "vmem_capacity_bytes", 0))
        if cap > 0:
            return cap
    except Exception:
        pass
    return 64 * 1024 * 1024


# -----------------------------------------------------------------------------
# Pass 1: conv as 2 accumulating MXU matmuls per row-tile + per-tile partial stats.
# -----------------------------------------------------------------------------
def _conv_stats_kernel(body_ref, halo_ref, wa_ref, wb_ref, y_ref, stat_ref):
    # body_ref: (1, TOH, 2, OW+1, 2*Cin)  row-parity split, column-pair-merged input rows
    # halo_ref: (1, 1,   2, OW+1, 2*Cin)  next even row (halo for the kh=2 taps)
    # wa_ref  : (6*Cin, Cp)               taps (kh=0..2, kw in {0,1}) merged along K
    # wb_ref  : (3*Cin, Cp)               taps (kh=0..2, kw=2)        merged along K
    # y_ref   : (1, TOH*OW, Cp)           un-normalized conv output tile
    # stat_ref: (1, 1, 2, Cp)             per-tile partial [sum, sum_sq]
    body = body_ref[0]                       # (TOH, 2, OW+1, C2)
    halo = halo_ref[0]                       # (1,   2, OW+1, C2)
    toh, _, owp, c2 = body.shape
    cin = c2 // 2
    ow = owp - 1
    s_tile = toh * ow

    even = body[:, 0]                        # padded input rows 2r      (kh = 0 taps)
    odd = body[:, 1]                         # padded input rows 2r + 1  (kh = 1 taps)
    if toh == 1:
        even_next = halo[:, 0]               # padded input rows 2r + 2  (kh = 2 taps)
    else:
        even_next = jnp.concatenate([even[1:], halo[:, 0]], axis=0)

    # Group A: kw = 0,1 (both column parities) for all three kh -> one K = 6*Cin matmul.
    lhs_a = jnp.concatenate(
        [even[:, 0:ow, :], odd[:, 0:ow, :], even_next[:, 0:ow, :]],
        axis=-1).reshape(s_tile, 3 * c2)
    # Group B: kw = 2 (even column parity only, no zero weight half) -> one K = 3*Cin matmul.
    lhs_b = jnp.concatenate(
        [even[:, 1:owp, 0:cin], odd[:, 1:owp, 0:cin], even_next[:, 1:owp, 0:cin]],
        axis=-1).reshape(s_tile, 3 * cin)

    # Value-chained accumulation: no VMEM read-modify-write on a scratch accumulator.
    acc = jnp.dot(lhs_a, wa_ref[...], preferred_element_type=jnp.float32)
    acc = acc + jnp.dot(lhs_b, wb_ref[...], preferred_element_type=jnp.float32)

    y_ref[0] = acc.astype(y_ref.dtype)
    stat_ref[0, 0] = jnp.concatenate(
        [jnp.sum(acc, axis=0, keepdims=True),
         jnp.sum(acc * acc, axis=0, keepdims=True)], axis=0)


# -----------------------------------------------------------------------------
# Pass 2: InstanceNorm (one-pass stats: var = E[y^2] - mean^2) + ReLU, lane-dense store.
# -----------------------------------------------------------------------------
def _norm_relu_kernel(stat_ref, y_ref, o_ref, *, inv_s, eps):
    # stat_ref: (1, 2, Cp) f32 full-image [sum, sum_sq]
    # y_ref   : (1, S_BLK, Cp)
    # o_ref   : (1, S_BLK, Cp)  lane-dense (channel-padded) output
    stats = stat_ref[0]                           # (2, Cp)
    mean = stats[0:1, :] * inv_s                  # (1, Cp)
    ex2 = stats[1:2, :] * inv_s
    # TODO(synk): Welford / first-tile centering if this layer ever sees huge S with large DC offset.
    var = jnp.maximum(ex2 - mean * mean, 0.0)
    scale = jax.lax.rsqrt(var + eps)
    y = y_ref[0].astype(jnp.float32)              # (S_BLK, Cp)
    o_ref[0] = jnp.maximum((y - mean) * scale, 0.0).astype(o_ref.dtype)


def _pick_row_tile(oh, ow, cin, cp, in_bytes, y_bytes, budget_bytes):
    """Largest divisor of OH whose per-step live VMEM (double buffers + temporaries) fits."""
    c2 = 2 * cin
    quantum = 16  # keep the S-tile sublane-aligned for bf16/f32 output blocks

    def est(toh):
        s_tile = toh * ow
        body = 2 * toh * 2 * (ow + 1) * c2 * in_bytes        # body tile, double-buffered
        halo = 2 * 2 * (ow + 1) * c2 * in_bytes              # halo tile, double-buffered
        wgt = 2 * 9 * cin * cp * in_bytes                    # wa + wb, double-buffered
        yout = 2 * s_tile * cp * y_bytes                     # conv-output tile, double-buffered
        stat = 2 * 2 * cp * 4                                # partial stats
        tmp = s_tile * (3 * c2 + 3 * cin) * in_bytes + s_tile * cp * 4   # lhs_a / lhs_b / acc
        return body + halo + wgt + yout + stat + tmp

    divisors = [d for d in range(1, oh + 1) if oh % d == 0]
    valid = [d for d in divisors if d == oh or (d * ow) % quantum == 0]
    fitting = [d for d in valid if est(d) <= budget_bytes]
    toh = max(fitting) if fitting else min(valid)
    return toh, est(toh)


def _pick_s_block(s, cp, y_bytes, out_bytes, budget_bytes):
    """Pass-2 spatial block, decoupled from pass 1 (no weights, pure elementwise)."""
    def est(blk):
        return (2 * blk * cp * y_bytes + 2 * blk * cp * out_bytes
                + 2 * 2 * cp * 4 + blk * cp * 4)

    divisors = [d for d in range(1, s + 1) if s % d == 0 and (d == s or d % 16 == 0)]
    fitting = [d for d in divisors if est(d) <= budget_bytes]
    return max(fitting) if fitting else min(divisors)


def conv_down_2_forward_nhwc(x_nhwc, weight, bias=None, *,
                             compute_dtype=jnp.bfloat16,
                             vmem_budget_bytes=None):
    """Conv_down_2.forward (Conv2d 3x3 s=2 p=1 -> InstanceNorm2d -> ReLU), NHWC in/out.

    `bias` is accepted for API parity but ignored: a per-channel constant is cancelled
    exactly by InstanceNorm's mean subtraction (affine=False) before the ReLU.
    """
    del bias  # cancels under InstanceNorm
    n, h, w, cin = x_nhwc.shape
    cout = weight.shape[0]
    assert weight.shape == (cout, cin, 3, 3), weight.shape
    assert h % 2 == 0 and w % 2 == 0, "TODO(synk): odd spatial sizes need edge masking"
    oh, ow = h // 2, w // 2
    s = oh * ow
    c2 = 2 * cin
    cp = max(128, -(-cout // 128) * 128)          # lane-dense padded channel dim
    in_bytes = jnp.dtype(compute_dtype).itemsize
    y_dtype = compute_dtype
    out_dtype = x_nhwc.dtype
    out_bytes = jnp.dtype(out_dtype).itemsize

    phys_vmem = _vmem_capacity_bytes()
    if vmem_budget_bytes is None:
        # ~half of physical VMEM: ~64 MiB on 128-MiB v5e/v6e, ~32 MiB on 64-MiB v7x.
        vmem_budget_bytes = phys_vmem // 2

    # ---- host glue: zero-pad + *free* reshape (no im2col blowup, no transpose).
    #   xph[n, r, a, c, b*Cin + ci] == x_padded[n, 2r + a, 2c + b, ci]
    xp = jnp.pad(x_nhwc.astype(compute_dtype), ((0, 0), (1, 1), (1, 1), (0, 0)))
    xph = xp.reshape(n, oh + 1, 2, ow + 1, c2)

    # ---- weight packing (tiny):
    #   wa[kh*2*Cin + kw*Cin + ci, co] = weight[co, ci, kh, kw]   for kw in {0, 1}
    #   wb[kh*Cin + ci, co]            = weight[co, ci, kh, 2]
    wt = jnp.transpose(weight, (2, 3, 1, 0)).astype(jnp.float32)      # (3, 3, Cin, Cout)
    wa = wt[:, 0:2, :, :].reshape(6 * cin, cout)
    wb = wt[:, 2, :, :].reshape(3 * cin, cout)
    wa = jnp.pad(wa, ((0, 0), (0, cp - cout))).astype(compute_dtype)
    wb = jnp.pad(wb, ((0, 0), (0, cp - cout))).astype(compute_dtype)

    toh, live_bytes = _pick_row_tile(oh, ow, cin, cp, in_bytes,
                                     jnp.dtype(y_dtype).itemsize, vmem_budget_bytes)
    t_tiles = oh // toh
    s_tile = toh * ow
    vmem_limit_1 = int(min(int(0.85 * phys_vmem),
                           max(live_bytes + (8 << 20), 24 << 20)))

    # ---- pass 1: conv tiles (2 MXU matmuls each) + per-tile partial sum / sum-of-squares.
    y, stats_part = pl.pallas_call(
        _conv_stats_kernel,
        out_shape=(jax.ShapeDtypeStruct((n, s, cp), y_dtype),
                   jax.ShapeDtypeStruct((n, t_tiles, 2, cp), jnp.float32)),
        grid=(n, t_tiles),
        in_specs=[
            pl.BlockSpec((1, toh, 2, ow + 1, c2), lambda b, t: (b, t, 0, 0, 0)),
            pl.BlockSpec((1, 1, 2, ow + 1, c2),
                         lambda b, t: (b, (t + 1) * toh, 0, 0, 0)),     # 1-row halo
            pl.BlockSpec((6 * cin, cp), lambda b, t: (0, 0)),           # resident weights
            pl.BlockSpec((3 * cin, cp), lambda b, t: (0, 0)),
        ],
        out_specs=(
            pl.BlockSpec((1, s_tile, cp), lambda b, t: (b, t, 0)),
            pl.BlockSpec((1, 1, 2, cp), lambda b, t: (b, t, 0, 0)),     # per-tile partial stats
        ),
        compiler_params=pltpu.CompilerParams(
            dimension_semantics=("parallel", "parallel"),
            vmem_limit_bytes=vmem_limit_1),
    )(xph, xph, wa, wb)

    # Tiny XLA reduction of the per-tile partials (n, t_tiles, 2, Cp) -> (n, 2, Cp).
    stats = jnp.sum(stats_part, axis=1)

    # ---- pass 2: InstanceNorm + ReLU. Independently (larger) tiled; lane-dense (Cp) store.
    s_blk = _pick_s_block(s, cp, jnp.dtype(y_dtype).itemsize, out_bytes, vmem_budget_bytes)
    vmem_limit_2 = int(min(int(0.85 * phys_vmem),
                           max(4 * s_blk * cp * 4 + (8 << 20), 24 << 20)))
    out_pad = pl.pallas_call(
        functools.partial(_norm_relu_kernel, inv_s=1.0 / float(s), eps=EPS),
        out_shape=jax.ShapeDtypeStruct((n, s, cp), out_dtype),
        grid=(n, s // s_blk),
        in_specs=[
            pl.BlockSpec((1, 2, cp), lambda b, t: (b, 0, 0)),
            pl.BlockSpec((1, s_blk, cp), lambda b, t: (b, t, 0)),
        ],
        out_specs=pl.BlockSpec((1, s_blk, cp), lambda b, t: (b, t, 0)),
        compiler_params=pltpu.CompilerParams(
            dimension_semantics=("parallel", "parallel"),
            vmem_limit_bytes=vmem_limit_2),
    )(stats, y)

    out = out_pad if cout == cp else out_pad[:, :, :cout]
    return out.reshape(n, oh, ow, cout)


def conv_down_2_forward(x_nchw, weight, bias=None, *, compute_dtype=jnp.bfloat16):
    """PyTorch-parity wrapper (NCHW in/out). Prefer the NHWC-native entry point and keep
    the whole network in NHWC to avoid these activation-sized transposes."""
    x_nhwc = jnp.transpose(x_nchw, (0, 2, 3, 1))
    out_nhwc = conv_down_2_forward_nhwc(x_nhwc, weight, bias, compute_dtype=compute_dtype)
    return jnp.transpose(out_nhwc, (0, 3, 1, 2))


def _reference(x_nchw, weight, bias):
    """Pure-JAX reference matching the PyTorch module (bias included: it cancels)."""
    y = jax.lax.conv_general_dilated(
        x_nchw, weight, window_strides=(2, 2), padding=((1, 1), (1, 1)),
        dimension_numbers=("NCHW", "OIHW", "NCHW"))
    y = y + bias[None, :, None, None]
    mean = jnp.mean(y, axis=(2, 3), keepdims=True)
    var = jnp.mean((y - mean) ** 2, axis=(2, 3), keepdims=True)
    y = (y - mean) * jax.lax.rsqrt(var + EPS)
    return jnp.maximum(y, 0.0)


if __name__ == "__main__":
    key = jax.random.PRNGKey(0)
    k_x, k_w, k_b = jax.random.split(key, 3)

    N, Cin, H, W = 2, 4, 16, 16
    Cout = 8

    x = jax.random.normal(k_x, (N, Cin, H, W), dtype=jnp.float32)
    fan_in = Cin * 3 * 3
    weight = jax.random.normal(k_w, (Cout, Cin, 3, 3), dtype=jnp.float32) / jnp.sqrt(fan_in)
    bias = jax.random.normal(k_b, (Cout,), dtype=jnp.float32) * 0.1

    ref = jax.block_until_ready(_reference(x, weight, bias))

    # Default bf16 MXU path (f32 accumulation / stats).
    out_bf16 = jax.block_until_ready(conv_down_2_forward(x, weight, bias))
    assert out_bf16.shape == (N, Cout, H // 2, W // 2), out_bf16.shape
    assert jnp.allclose(out_bf16, ref, atol=5e-2, rtol=5e-2), \
        float(jnp.max(jnp.abs(out_bf16 - ref)))

    # f32 path for a tight exactness check against the pure-JAX reference.
    out_f32 = jax.block_until_ready(
        conv_down_2_forward(x, weight, bias, compute_dtype=jnp.float32))
    assert jnp.allclose(out_f32, ref, atol=5e-4, rtol=5e-4), \
        float(jnp.max(jnp.abs(out_f32 - ref)))

    print("KERNEL_OK")
</pallas_src>

<mosaic_0001>
module attributes {stable_mosaic.version = 11 : i64} {
  func.func @_conv_stats_kernel(%arg0: i32, %arg1: i32, %arg2: memref<1x8x2x9x8xbf16, #tpu.memory_space<vmem>>, %arg3: memref<1x1x2x9x8xbf16, #tpu.memory_space<vmem>>, %arg4: memref<24x128xbf16, #tpu.memory_space<vmem>>, %arg5: memref<12x128xbf16, #tpu.memory_space<vmem>>, %arg6: memref<1x64x128xbf16, #tpu.memory_space<vmem>>, %arg7: memref<1x1x2x128xf32, #tpu.memory_space<vmem>>) attributes {dimension_semantics = [#tpu.dimension_semantics<parallel>, #tpu.dimension_semantics<parallel>], iteration_bounds = array<i64: 2, 1>, scalar_prefetch = 0 : i64, scratch_operands = 0 : i64, tpu.core_type = #tpu.core_type<tc>, window_params = [{transform_indices = @transform_0, window_bounds = array<i64: 1, 8, 2, 9, 8>}, {transform_indices = @transform_1, window_bounds = array<i64: 1, 1, 2, 9, 8>}, {pipeline_mode = #tpu.pipeline_mode<synchronous>, transform_indices = @transform_2, window_bounds = array<i64: 24, 128>}, {pipeline_mode = #tpu.pipeline_mode<synchronous>, transform_indices = @transform_3, window_bounds = array<i64: 12, 128>}, {transform_indices = @transform_4, window_bounds = array<i64: 1, 64, 128>}, {transform_indices = @transform_5, window_bounds = array<i64: 1, 1, 2, 128>}]} {
    %c0 = arith.constant 0 : index
    %c0_0 = arith.constant 0 : index
    %c0_1 = arith.constant 0 : index
    %c0_2 = arith.constant 0 : index
    %c0_3 = arith.constant 0 : index
    %0 = vector.load %arg2[%c0, %c0_0, %c0_1, %c0_2, %c0_3] : memref<1x8x2x9x8xbf16, #tpu.memory_space<vmem>>, vector<1x8x2x9x8xbf16>
    %1 = vector.shape_cast %0 : vector<1x8x2x9x8xbf16> to vector<8x2x9x8xbf16>
    %c0_4 = arith.constant 0 : index
    %c0_5 = arith.constant 0 : index
    %c0_6 = arith.constant 0 : index
    %c0_7 = arith.constant 0 : index
    %c0_8 = arith.constant 0 : index
    %2 = vector.load %arg3[%c0_4, %c0_5, %c0_6, %c0_7, %c0_8] : memref<1x1x2x9x8xbf16, #tpu.memory_space<vmem>>, vector<1x1x2x9x8xbf16>
    %3 = vector.shape_cast %2 : vector<1x1x2x9x8xbf16> to vector<1x2x9x8xbf16>
    %4 = vector.extract_strided_slice %1 {offsets = [0, 0, 0, 0], sizes = [8, 1, 9, 8], strides = [1, 1, 1, 1]} : vector<8x2x9x8xbf16> to vector<8x1x9x8xbf16>
    %5 = vector.shape_cast %4 : vector<8x1x9x8xbf16> to vector<8x9x8xbf16>
    %6 = vector.extract_strided_slice %1 {offsets = [0, 1, 0, 0], sizes = [8, 1, 9, 8], strides = [1, 1, 1, 1]} : vector<8x2x9x8xbf16> to vector<8x1x9x8xbf16>
    %7 = vector.shape_cast %6 : vector<8x1x9x8xbf16> to vector<8x9x8xbf16>
    %8 = vector.extract_strided_slice %5 {offsets = [1, 0, 0], sizes = [7, 9, 8], strides = [1, 1, 1]} : vector<8x9x8xbf16> to vector<7x9x8xbf16>
    %9 = vector.extract_strided_slice %3 {offsets = [0, 0, 0, 0], sizes = [1, 1, 9, 8], strides = [1, 1, 1, 1]} : vector<1x2x9x8xbf16> to vector<1x1x9x8xbf16>
    %10 = vector.shape_cast %9 : vector<1x1x9x8xbf16> to vector<1x9x8xbf16>
    %11 = tpu.concatenate %8, %10 in 0 : vector<7x9x8xbf16>, vector<1x9x8xbf16> -> vector<8x9x8xbf16>
    %12 = vector.extract_strided_slice %5 {offsets = [0, 0, 0], sizes = [8, 8, 8], strides = [1, 1, 1]} : vector<8x9x8xbf16> to vector<8x8x8xbf16>
    %13 = vector.extract_strided_slice %7 {offsets = [0, 0, 0], sizes = [8, 8, 8], strides = [1, 1, 1]} : vector<8x9x8xbf16> to vector<8x8x8xbf16>
    %14 = vector.extract_strided_slice %11 {offsets = [0, 0, 0], sizes = [8, 8, 8], strides = [1, 1, 1]} : vector<8x9x8xbf16> to vector<8x8x8xbf16>
    %15 = tpu.concatenate %12, %13, %14 in 2 : vector<8x8x8xbf16>, vector<8x8x8xbf16>, vector<8x8x8xbf16> -> vector<8x8x24xbf16>
    %16 = vector.shape_cast %15 : vector<8x8x24xbf16> to vector<64x24xbf16>
    %17 = vector.extract_strided_slice %5 {offsets = [0, 1, 0], sizes = [8, 8, 4], strides = [1, 1, 1]} : vector<8x9x8xbf16> to vector<8x8x4xbf16>
    %18 = vector.extract_strided_slice %7 {offsets = [0, 1, 0], sizes = [8, 8, 4], strides = [1, 1, 1]} : vector<8x9x8xbf16> to vector<8x8x4xbf16>
    %19 = vector.extract_strided_slice %11 {offsets = [0, 1, 0], sizes = [8, 8, 4], strides = [1, 1, 1]} : vector<8x9x8xbf16> to vector<8x8x4xbf16>
    %20 = tpu.concatenate %17, %18, %19 in 2 : vector<8x8x4xbf16>, vector<8x8x4xbf16>, vector<8x8x4xbf16> -> vector<8x8x12xbf16>
    %21 = vector.shape_cast %20 : vector<8x8x12xbf16> to vector<64x12xbf16>
    %c0_9 = arith.constant 0 : index
    %c0_10 = arith.constant 0 : index
    %22 = vector.load %arg4[%c0_9, %c0_10] : memref<24x128xbf16, #tpu.memory_space<vmem>>, vector<24x128xbf16>
    %cst = arith.constant dense<0.000000e+00> : vector<64x128xf32>
    %23 = tpu.matmul %16, %22, %cst {dimension_numbers = #tpu.dot_dimension_numbers<[1], [0], [0], [1], [0, 0, 1, 1], [], []>} : vector<64x24xbf16>, vector<24x128xbf16>, vector<64x128xf32> -> vector<64x128xf32>
    %c0_11 = arith.constant 0 : index
    %c0_12 = arith.constant 0 : index
    %24 = vector.load %arg5[%c0_11, %c0_12] : memref<12x128xbf16, #tpu.memory_space<vmem>>, vector<12x128xbf16>
    %cst_13 = arith.constant dense<0.000000e+00> : vector<64x128xf32>
    %25 = tpu.matmul %21, %24, %cst_13 {dimension_numbers = #tpu.dot_dimension_numbers<[1], [0], [0], [1], [0, 0, 1, 1], [], []>} : vector<64x12xbf16>, vector<12x128xbf16>, vector<64x128xf32> -> vector<64x128xf32>
    %26 = arith.addf %23, %25 : vector<64x128xf32>
    %27 = arith.truncf %26 : vector<64x128xf32> to vector<64x128xbf16>
    %c0_14 = arith.constant 0 : index
    %c0_15 = arith.constant 0 : index
    %c0_16 = arith.constant 0 : index
    %28 = vector.load %arg6[%c0_14, %c0_15, %c0_16] : memref<1x64x128xbf16, #tpu.memory_space<vmem>>, vector<1x64x128xbf16>
    %29 = vector.shape_cast %28 : vector<1x64x128xbf16> to vector<64x128xbf16>
    %30 = vector.shape_cast %27 : vector<64x128xbf16> to vector<1x64x128xbf16>
    tpu.vector_store %arg6[%c0_14, %c0_15, %c0_16], %30 {strides = array<i32>} : memref<1x64x128xbf16, #tpu.memory_space<vmem>>, vector<1x64x128xbf16>,
    %cst_17 = arith.constant dense<0.000000e+00> : vector<128xf32>
    %31 = vector.multi_reduction <add>, %26, %cst_17 [0] : vector<64x128xf32> to vector<128xf32>
    %32 = vector.shape_cast %31 : vector<128xf32> to vector<1x128xf32>
    %33 = arith.mulf %26, %26 : vector<64x128xf32>
    %cst_18 = arith.constant dense<0.000000e+00> : vector<128xf32>
    %34 = vector.multi_reduction <add>, %33, %cst_18 [0] : vector<64x128xf32> to vector<128xf32>
    %35 = vector.shape_cast %34 : vector<128xf32> to vector<1x128xf32>
    %36 = tpu.concatenate %32, %35 in 0 : vector<1x128xf32>, vector<1x128xf32> -> vector<2x128xf32>
    %c0_19 = arith.constant 0 : index
    %c0_20 = arith.constant 0 : index
    %c0_21 = arith.constant 0 : index
    %c0_22 = arith.constant 0 : index
    %37 = vector.load %arg7[%c0_19, %c0_20, %c0_21, %c0_22] : memref<1x1x2x128xf32, #tpu.memory_space<vmem>>, vector<1x1x2x128xf32>
    %38 = vector.shape_cast %37 : vector<1x1x2x128xf32> to vector<2x128xf32>
    %39 = vector.shape_cast %36 : vector<2x128xf32> to vector<1x1x2x128xf32>
    tpu.vector_store %arg7[%c0_19, %c0_20, %c0_21, %c0_22], %39 {strides = array<i32>} : memref<1x1x2x128xf32, #tpu.memory_space<vmem>>, vector<1x1x2x128xf32>,
    return
  }
  func.func @transform_0(%arg0: i32, %arg1: i32) -> (i32, i32, i32, i32, i32) {
    %c0_i32 = arith.constant 0 : i32
    %c0_i32_0 = arith.constant 0 : i32
    %c0_i32_1 = arith.constant 0 : i32
    %c0_i32_2 = arith.constant 0 : i32
    return %arg0, %arg1, %c0_i32, %c0_i32_0, %c0_i32_1 : i32, i32, i32, i32, i32
  }
  func.func @transform_1(%arg0: i32, %arg1: i32) -> (i32, i32, i32, i32, i32) {
    %c1_i32 = arith.constant 1 : i32
    %0 = arith.addi %arg1, %c1_i32 : i32
    %c8_i32 = arith.constant 8 : i32
    %1 = arith.muli %0, %c8_i32 : i32
    %c0_i32 = arith.constant 0 : i32
    %c0_i32_0 = arith.constant 0 : i32
    %c0_i32_1 = arith.constant 0 : i32
    %c0_i32_2 = arith.constant 0 : i32
    return %arg0, %1, %c0_i32, %c0_i32_0, %c0_i32_1 : i32, i32, i32, i32, i32
  }
  func.func @transform_2(%arg0: i32, %arg1: i32) -> (i32, i32) {
    %c0_i32 = arith.constant 0 : i32
    %c0_i32_0 = arith.constant 0 : i32
    %c0_i32_1 = arith.constant 0 : i32
    return %c0_i32, %c0_i32_0 : i32, i32
  }
  func.func @transform_3(%arg0: i32, %arg1: i32) -> (i32, i32) {
    %c0_i32 = arith.constant 0 : i32
    %c0_i32_0 = arith.constant 0 : i32
    %c0_i32_1 = arith.constant 0 : i32
    return %c0_i32, %c0_i32_0 : i32, i32
  }
  func.func @transform_4(%arg0: i32, %arg1: i32) -> (i32, i32, i32) {
    %c0_i32 = arith.constant 0 : i32
    %c0_i32_0 = arith.constant 0 : i32
    return %arg0, %arg1, %c0_i32 : i32, i32, i32
  }
  func.func @transform_5(%arg0: i32, %arg1: i32) -> (i32, i32, i32, i32) {
    %c0_i32 = arith.constant 0 : i32
    %c0_i32_0 = arith.constant 0 : i32
    %c0_i32_1 = arith.constant 0 : i32
    return %arg0, %arg1, %c0_i32, %c0_i32_0 : i32, i32, i32, i32
  }
}

</mosaic_0001>

<llo_original>
// kernel: tpu_custom_call.1
$region0: #{tpu_custom_call.1}
  #allocation0 [shape = 'u32[]', space=smem, size = 0x4, offset = 0x4, fixed_abs, tag = 'smem constant byte address 0x4 - core index']
  #allocation1 [shape = 'u32[144,128]{1,0:T(1,128)}', space=vmem, size = 0x12000, scoped, tag = 'internal scratch']
  %s0 = inlined_call_operand.vmem [shape: bf16[2,9,2,9,8], index: 0, kind: input, shape index: {}]
  %s1 = inlined_call_operand.vmem [shape: bf16[2,9,2,9,8], index: 1, kind: input, shape index: {}]
  %s2 = inlined_call_operand.vmem [shape: bf16[24,128], index: 2, kind: input, shape index: {}]
  %s3 = inlined_call_operand.vmem [shape: bf16[12,128], index: 3, kind: input, shape index: {}]
  %s4 = inlined_call_operand.hbm [shape: bf16[2,64,128], index: 4, kind: output, shape index: {0}]
  %s5 = inlined_call_operand.hbm [shape: f32[2,1,2,128], index: 5, kind: output, shape index: {1}]
  %6 = xla_tuple %s4, %s5
  %s7 = sld [smem:[#allocation0]]
  $region57: #{tpu_custom_call.1} parent=0
    _
  %s9 = ssub.s32 1, %s7
  %s10 = scalar_select 0, %s9, %s7
  $region1: #{tpu_custom_call.1} parent=0
    #allocation2 [shape = 'u8[32768]{0}', space=vmem, size = 0x8000, scoped, tag = 'output window, operand 0']
    #allocation3 [shape = 's32[2]{0}', space=sflag, size = 0x8, scoped, tag = 'scoped memory for tpu_custom_call.1']
    #allocation4 [shape = 'u8[2048]{0}', space=vmem, size = 0x800, scoped, tag = 'output window, operand 1']
    #allocation5 [shape = 's32[2]{0}', space=sflag, size = 0x8, scoped, tag = 'scoped memory for tpu_custom_call.1']
    %11 = vsyncpa [#allocation3], 0
    %s12 = scalar_lea.sflag [#allocation3], 1
    %13 = vsyncpa %s12, 0
    %14 = vsyncpa [#allocation5], 0
    %s15 = scalar_lea.sflag [#allocation5], 1
    %16 = vsyncpa %s15, 0
    loop: start=0, step=1, limit=4
    $region2: #{tpu_custom_call.1} parent=1 // loop_pre_header
      _
    $region3: #{tpu_custom_call.1} parent=1 // loop_header
      %s18 = sphi 0, %s22
      %p19 = scmp.ge.s32.totalorder %s18, 4
      %s25 = sphi 0, %s37
      %s26 = sphi 0, %s33
      %s27 = sphi 0, %s25
      %s28 = sphi 0, %s26
      %s29 = sphi 0, %s27
      %s30 = sphi 0, %s28
      %s42 = sphi 0, %s44
      %s45 = sphi 0, %s42
      %s46 = sphi 0, %s45
      %s62 = sphi 0, %s46
      %s74 = sphi 0, %s76
      %s77 = sphi 0, %s74
      %s78 = sphi 0, %s77
      %s94 = sphi 0, %s78
      %s98 = sphi 0, %s98
      %s100 = sphi 0, %s98
      %s101 = sphi 0, %s100
      %s115 = sphi 0, %s101
      %s119 = sphi 0, %s119
      %s121 = sphi 0, %s119
      %s122 = sphi 0, %s121
      %s136 = sphi 0, %s122
      %s144 = sphi 0, %s146
      %s147 = sphi 0, %s144
      %s148 = sphi 0, %s147
      %s164 = sphi 0, %s148
      %s172 = sphi 0, %s174
      %s175 = sphi 0, %s172
      %s176 = sphi 0, %s175
      %s192 = sphi 0, %s176
    $region4: #{tpu_custom_call.1} parent=1 // loop_header_branch
      %21 = sbr.rel (%p19) target = $region8
    $region5: #{tpu_custom_call.1} parent=1 // loop_body
      %s23 = ssub.s32 %s18, 1
      %s24 = ssub.s32 %s18, 2
      %s31 = sadd.s32 1, %s26
      %p32 = scmp.ge.s32.totalorder %s31, 1
      %s33 = scalar_select %p32, 0, %s31
      %s34 = sadd.s32 1, %s25
      %s35 = scalar_select %p32, %s34, %s25
      %p36 = scmp.ge.s32.totalorder %s35, 2
      %s37 = scalar_select %p36, 0, %s35
      %s38 = ssub.s32 %s25, %s37
      %s39 = ssub.s32 %s26, %s33
      %s40 = sor.u32 %s38, %s39
      %p41 = scmp.eq.s32.totalorder %s40, 0
      %s43 = sadd.s32 %s42, 1
      %s44 = scalar_select %p41, %s42, %s43
      %p47 = pneg %p41
      %p48 = scmp.eq.s32.totalorder %s18, 1
      %p49 = por %p47, %p48
      %p50 = scmp.ne.s32.totalorder %s42, %s45
      %p51 = scmp.eq.s32.totalorder %s18, 0
      %p52 = por %p50, %p51
      %p53 = scmp.ne.s32.totalorder %s42, %s45
      %p54 = scmp.eq.s32.totalorder %s23, 1
      %p55 = por %p53, %p54
      %p56 = scmp.ne.s32.totalorder %s45, %s46
      %p57 = scmp.eq.s32.totalorder %s23, 0
      %p58 = por %p56, %p57
      %p59 = scmp.ne.s32.totalorder %s45, %s46
      %p60 = scmp.eq.s32.totalorder %s24, 1
      %p61 = por %p59, %p60
      %p63 = scmp.ne.s32.totalorder %s46, %s62
      %p64 = scmp.eq.s32.totalorder %s24, 0
      %p65 = por %p63, %p64
      %s66 = sadd.s32 %s26, 1
      %s67 = smul.u32 %s66, 8
      %s68 = sadd.s32 %s33, 1
      %s69 = smul.u32 %s68, 8
      %s70 = ssub.s32 %s25, %s37
      %s71 = ssub.s32 %s67, %s69
      %s72 = sor.u32 %s70, %s71
      %p73 = scmp.eq.s32.totalorder %s72, 0
      %s75 = sadd.s32 %s74, 1
      %s76 = scalar_select %p73, %s74, %s75
      %p79 = pneg %p73
      %p80 = scmp.eq.s32.totalorder %s18, 1
      %p81 = por %p79, %p80
      %p82 = scmp.ne.s32.totalorder %s74, %s77
      %p83 = scmp.eq.s32.totalorder %s18, 0
      %p84 = por %p82, %p83
      %p85 = scmp.ne.s32.totalorder %s74, %s77
      %p86 = scmp.eq.s32.totalorder %s23, 1
      %p87 = por %p85, %p86
      %p88 = scmp.ne.s32.totalorder %s77, %s78
      %p89 = scmp.eq.s32.totalorder %s23, 0
      %p90 = por %p88, %p89
      %p91 = scmp.ne.s32.totalorder %s77, %s78
      %p92 = scmp.eq.s32.totalorder %s24, 1
      %p93 = por %p91, %p92
      %p95 = scmp.ne.s32.totalorder %s78, %s94
      %p96 = scmp.eq.s32.totalorder %s24, 0
      %p97 = por %p95, %p96
      %s99 = sadd.s32 %s98, 1
      %p102 = scmp.eq.s32.totalorder %s18, 1
      %p103 = scmp.ne.s32.totalorder %s98, %s100
      %p104 = scmp.eq.s32.totalorder %s18, 0
      %p105 = por %p103, %p104
      %p106 = scmp.ne.s32.totalorder %s98, %s100
      %p107 = scmp.eq.s32.totalorder %s23, 1
      %p108 = por %p106, %p107
      %p109 = scmp.ne.s32.totalorder %s100, %s101
      %p110 = scmp.eq.s32.totalorder %s23, 0
      %p111 = por %p109, %p110
      %p112 = scmp.ne.s32.totalorder %s100, %s101
      %p113 = scmp.eq.s32.totalorder %s24, 1
      %p114 = por %p112, %p113
      %p116 = scmp.ne.s32.totalorder %s101, %s115
      %p117 = scmp.eq.s32.totalorder %s24, 0
      %p118 = por %p116, %p117
      %s120 = sadd.s32 %s119, 1
      %p123 = scmp.eq.s32.totalorder %s18, 1
      %p124 = scmp.ne.s32.totalorder %s119, %s121
      %p125 = scmp.eq.s32.totalorder %s18, 0
      %p126 = por %p124, %p125
      %p127 = scmp.ne.s32.totalorder %s119, %s121
      %p128 = scmp.eq.s32.totalorder %s23, 1
      %p129 = por %p127, %p128
      %p130 = scmp.ne.s32.totalorder %s121, %s122
      %p131 = scmp.eq.s32.totalorder %s23, 0
      %p132 = por %p130, %p131
      %p133 = scmp.ne.s32.totalorder %s121, %s122
      %p134 = scmp.eq.s32.totalorder %s24, 1
      %p135 = por %p133, %p134
      %p137 = scmp.ne.s32.totalorder %s122, %s136
      %p138 = scmp.eq.s32.totalorder %s24, 0
      %p139 = por %p137, %p138
      %s140 = ssub.s32 %s25, %s37
      %s141 = ssub.s32 %s26, %s33
      %s142 = sor.u32 %s140, %s141
      %p143 = scmp.eq.s32.totalorder %s142, 0
      %s145 = sadd.s32 %s144, 1
      %s146 = scalar_select %p143, %s144, %s145
      %p149 = pneg %p143
      %p150 = scmp.eq.s32.totalorder %s18, 1
      %p151 = por %p149, %p150
      %p152 = scmp.ne.s32.totalorder %s144, %s147
      %p153 = scmp.eq.s32.totalorder %s18, 0
      %p154 = por %p152, %p153
      %p155 = scmp.ne.s32.totalorder %s144, %s147
      %p156 = scmp.eq.s32.totalorder %s23, 1
      %p157 = por %p155, %p156
      %p158 = scmp.ne.s32.totalorder %s147, %s148
      %p159 = scmp.eq.s32.totalorder %s23, 0
      %p160 = por %p158, %p159
      %p161 = scmp.ne.s32.totalorder %s147, %s148
      %p162 = scmp.eq.s32.totalorder %s24, 1
      %p163 = por %p161, %p162
      %p165 = scmp.ne.s32.totalorder %s148, %s164
      %p166 = scmp.eq.s32.totalorder %s24, 0
      %p167 = por %p165, %p166
      %s168 = ssub.s32 %s25, %s37
      %s169 = ssub.s32 %s26, %s33
      %s170 = sor.u32 %s168, %s169
      %p171 = scmp.eq.s32.totalorder %s170, 0
      %s173 = sadd.s32 %s172, 1
      %s174 = scalar_select %p171, %s172, %s173
      %p177 = pneg %p171
      %p178 = scmp.eq.s32.totalorder %s18, 1
      %p179 = por %p177, %p178
      %p180 = scmp.ne.s32.totalorder %s172, %s175
      %p181 = scmp.eq.s32.totalorder %s18, 0
      %p182 = por %p180, %p181
      %p183 = scmp.ne.s32.totalorder %s172, %s175
      %p184 = scmp.eq.s32.totalorder %s23, 1
      %p185 = por %p183, %p184
      %p186 = scmp.ne.s32.totalorder %s175, %s176
      %p187 = scmp.eq.s32.totalorder %s23, 0
      %p188 = por %p186, %p187
      %p189 = scmp.ne.s32.totalorder %s175, %s176
      %p190 = scmp.eq.s32.totalorder %s24, 1
      %p191 = por %p189, %p190
      %p193 = scmp.ne.s32.totalorder %s176, %s192
      %p194 = scmp.eq.s32.totalorder %s24, 0
      %p195 = por %p193, %p194
      %p196 = scmp.le.s32.totalorder 1, %s18
      %p197 = scmp.lt.s32.totalorder %s18, 3
      %p198 = pnand %p196, %p197
      %p199 = pneg %p198
      // Predicated region
      $region9: #{tpu_custom_call.1} parent=5 // pred_check
        _
      $region10: #{tpu_custom_call.1} parent=5 // pred_check_branch
        %201 = sbr.rel (%p198) target = $region12
      $region11: #{tpu_custom_call.1} parent=5 // pred_region
        %s202 = ssub.s32 %s18, 1
        // Predicated region
        $region13: #{tpu_custom_call.1} parent=11 // pred_check
          %p203 = pneg %p111
        $region14: #{tpu_custom_call.1} parent=11 // pred_check_branch
          %205 = sbr.rel (%p203) target = $region16
        $region15: #{tpu_custom_call.1} parent=11 // pred_region
          _
        $region16: #{tpu_custom_call.1} parent=11 // pred_fallthru
          _
        // Predicated region
        $region17: #{tpu_custom_call.1} parent=11 // pred_check
          %p206 = pneg %p132
        $region18: #{tpu_custom_call.1} parent=11 // pred_check_branch
          %208 = sbr.rel (%p206) target = $region20
        $region19: #{tpu_custom_call.1} parent=11 // pred_region
          _
        $region20: #{tpu_custom_call.1} parent=11 // pred_fallthru
          _
      $region12: #{tpu_custom_call.1} parent=5 // pred_fallthru
        _
      %p209 = scmp.lt.s32.totalorder %s18, 2
      // Predicated region
      $region21: #{tpu_custom_call.1} parent=5 // pred_check
        %p210 = pneg %p209
      $region22: #{tpu_custom_call.1} parent=5 // pred_check_branch
        %212 = sbr.rel (%p210) target = $region24
      $region23: #{tpu_custom_call.1} parent=5 // pred_region
        // Predicated region
        $region25: #{tpu_custom_call.1} parent=23 // pred_check
          %p213 = pneg %p52
        $region26: #{tpu_custom_call.1} parent=23 // pred_check_branch
          %215 = sbr.rel (%p213) target = $region28
        $region27: #{tpu_custom_call.1} parent=23 // pred_region
          %s216 = smul.u32 8, %s26
          %s217 = ssub.s32 9, %s216
          %p218 = scmp.lt.s32.totalorder %s217, 8
          %s219 = scalar_select %p218, %s217, 8
          %s220 = smul.u32 64, %s219
          %s221 = smul.u32 %s220, 2
          %s222 = smul.u32 %s221, 2
          %p223 = scmp.lt.s32.totalorder %s25, 1
          %s224 = scalar_select %p223, %s25, 1
          %p225 = scmp.lt.s32.totalorder %s216, 8
          %s226 = scalar_select %p225, %s216, 8
          %s227 = smul.addr %s226, 4
          %s228 = smul.addr %s224, 36
          %s229 = sadd.s32 %s227, %s228
          %s230 = smul.addr %s229, 4
          %s231 = scalar_lea.vmem %s0, %s230
          %s232 = smul.u32 8, %s26
          %s233 = ssub.s32 9, %s232
          %p234 = scmp.lt.s32.totalorder %s233, 8
          %s235 = scalar_select %p234, %s233, 8
          %s236 = smul.u32 64, %s235
          %s237 = smul.u32 %s236, 2
          %s238 = smul.u32 %s237, 2
        $region28: #{tpu_custom_call.1} parent=23 // pred_fallthru
          _
        // Predicated region
        $region29: #{tpu_custom_call.1} parent=23 // pred_check
          %p239 = pneg %p84
        $region30: #{tpu_custom_call.1} parent=23 // pred_check_branch
          %241 = sbr.rel (%p239) target = $region32
        $region31: #{tpu_custom_call.1} parent=23 // pred_region
          %s242 = sadd.s32 %s26, 1
          %s243 = smul.u32 %s242, 8
          %p244 = scmp.lt.s32.totalorder %s25, 1
          %s245 = scalar_select %p244, %s25, 1
          %p246 = scmp.lt.s32.totalorder %s243, 8
          %s247 = scalar_select %p246, %s243, 8
          %s248 = smul.addr %s247, 4
          %s249 = smul.addr %s245, 36
          %s250 = sadd.s32 %s248, %s249
          %s251 = smul.addr %s250, 4
          %s252 = scalar_lea.vmem %s1, %s251
          %s253 = sadd.s32 %s26, 1
          %s254 = smul.u32 %s253, 8
        $region32: #{tpu_custom_call.1} parent=23 // pred_fallthru
          _
      $region24: #{tpu_custom_call.1} parent=5 // pred_fallthru
        _
      %p255 = scmp.le.s32.totalorder 1, %s18
      %p256 = scmp.lt.s32.totalorder %s18, 3
      %p257 = pnand %p255, %p256
      %p258 = pneg %p257
      // Predicated region
      $region33: #{tpu_custom_call.1} parent=5 // pred_check
        _
      $region34: #{tpu_custom_call.1} parent=5 // pred_check_branch
        %260 = sbr.rel (%p257) target = $region36
      $region35: #{tpu_custom_call.1} parent=5 // pred_region
        %s261 = ssub.s32 %s18, 1
        %s262 = smul.u32 8, %s28
        %s263 = ssub.s32 9, %s262
        %p264 = scmp.lt.s32.totalorder %s263, 8
        %s265 = scalar_select %p264, %s263, 8
        %s266 = smul.u32 64, %s265
        %s267 = smul.u32 %s266, 2
        %s268 = smul.u32 %s267, 2
        %p269 = scmp.lt.s32.totalorder %s27, 1
        %s270 = scalar_select %p269, %s27, 1
        %p271 = scmp.lt.s32.totalorder %s262, 8
        %s272 = scalar_select %p271, %s262, 8
        %s273 = smul.addr %s272, 4
        %s274 = smul.addr %s270, 36
        %s275 = sadd.s32 %s273, %s274
        %s276 = smul.addr %s275, 4
        %s277 = scalar_lea.vmem %s0, %s276
        %p278 = pneg %p58
        %p279 = pneg %p55
        %s280 = sadd.s32 %s28, 1
        %s281 = smul.u32 %s280, 8
        %p282 = scmp.lt.s32.totalorder %s27, 1
        %s283 = scalar_select %p282, %s27, 1
        %p284 = scmp.lt.s32.totalorder %s281, 8
        %s285 = scalar_select %p284, %s281, 8
        %s286 = smul.addr %s285, 4
        %s287 = smul.addr %s283, 36
        %s288 = sadd.s32 %s286, %s287
        %s289 = smul.addr %s288, 4
        %s290 = scalar_lea.vmem %s1, %s289
        %p291 = pneg %p90
        %p292 = pneg %p87
        %p293 = pneg %p111
        %p294 = pneg %p108
        %p295 = pneg %p132
        %p296 = pneg %p129
        %p297 = pneg %p160
        %p298 = pneg %p157
        %s299 = sand.u32 %s147, 1
        %s300 = scalar_lea.sflag [#allocation3], %s299
        %s301 = sand.u32 %s147, 1
        %s302 = smul.addr %s301, 32
        %s303 = scalar_lea.vmem [#allocation2], %s302
        %p304 = pneg %p188
        %p305 = pneg %p185
        %s306 = sand.u32 %s175, 1
        %s307 = scalar_lea.sflag [#allocation5], %s306
        %s308 = sand.u32 %s175, 1
        %s309 = smul.addr %s308, 2
        %s310 = scalar_lea.vmem [#allocation4], %s309
        %s311 = smul.u32 8, %s28
        %s312 = ssub.s32 9, %s311
        %p313 = scmp.lt.s32.totalorder %s312, 8
        %s314 = scalar_select %p313, %s312, 8
        %s315 = smul.u32 64, %s314
        %s316 = smul.u32 %s315, 2
        %s317 = smul.u32 %s316, 2
        %p318 = scmp.lt.s32.totalorder %s27, 1
        %s319 = scalar_select %p318, %s27, 1
        %p320 = scmp.lt.s32.totalorder %s311, 8
        %s321 = scalar_select %p320, %s311, 8
        %s322 = smul.addr %s321, 4
        %s323 = smul.addr %s319, 36
        %s324 = sadd.s32 %s322, %s323
        %s325 = smul.addr %s324, 4
        %s326 = scalar_lea.vmem %s0, %s325
        %s327 = smul.u32 8, %s28
        %s328 = ssub.s32 9, %s327
        %p329 = scmp.lt.s32.totalorder %s328, 8
        %s330 = scalar_select %p329, %s328, 8
        %s331 = smul.u32 64, %s330
        %s332 = smul.u32 %s331, 2
        %s333 = smul.u32 %s332, 2
        %s334 = sadd.s32 %s28, 1
        %s335 = smul.u32 %s334, 8
        %p336 = scmp.lt.s32.totalorder %s27, 1
        %s337 = scalar_select %p336, %s27, 1
        %p338 = scmp.lt.s32.totalorder %s335, 8
        %s339 = scalar_select %p338, %s335, 8
        %s340 = smul.addr %s339, 4
        %s341 = smul.addr %s337, 36
        %s342 = sadd.s32 %s340, %s341
        %s343 = smul.addr %s342, 4
        %s344 = scalar_lea.vmem %s1, %s343
        %s345 = sadd.s32 %s28, 1
        %s346 = smul.u32 %s345, 8
        %s347 = smul.u32 8, %s28
        %v349 = vld [vmem:[%s326] sm:$0xf]
        %v350 = vld [vmem:[%s326 + $0x4] sm:$0x1]
        %v351 = vld [vmem:[%s326 + $0x8] sm:$0xf]
        %v352 = vld [vmem:[%s326 + $0xc] sm:$0x1]
        %v353 = vld [vmem:[%s326 + $0x10] sm:$0xf]
        %v354 = vld [vmem:[%s326 + $0x14] sm:$0x1]
        %v355 = vld [vmem:[%s326 + $0x18] sm:$0xf]
        %v356 = vld [vmem:[%s326 + $0x1c] sm:$0x1]
        %v357 = vld [vmem:[%s326 + $0x20] sm:$0xf]
        %v358 = vld [vmem:[%s326 + $0x24] sm:$0x1]
        %v359 = vld [vmem:[%s326 + $0x28] sm:$0xf]
        %v360 = vld [vmem:[%s326 + $0x2c] sm:$0x1]
        %v361 = vld [vmem:[%s326 + $0x30] sm:$0xf]
        %v362 = vld [vmem:[%s326 + $0x34] sm:$0x1]
        %v363 = vld [vmem:[%s326 + $0x38] sm:$0xf]
        %v364 = vld [vmem:[%s326 + $0x3c] sm:$0x1]
        %v365 = vld [vmem:[%s326 + $0x40] sm:$0xf]
        %v366 = vld [vmem:[%s326 + $0x44] sm:$0x1]
        %v367 = vld [vmem:[%s326 + $0x48] sm:$0xf]
        %v368 = vld [vmem:[%s326 + $0x4c] sm:$0x1]
        %v369 = vld [vmem:[%s326 + $0x50] sm:$0xf]
        %v370 = vld [vmem:[%s326 + $0x54] sm:$0x1]
        %v371 = vld [vmem:[%s326 + $0x58] sm:$0xf]
        %v372 = vld [vmem:[%s326 + $0x5c] sm:$0x1]
        %v373 = vld [vmem:[%s326 + $0x60] sm:$0xf]
        %v374 = vld [vmem:[%s326 + $0x64] sm:$0x1]
        %v375 = vld [vmem:[%s326 + $0x68] sm:$0xf]
        %v376 = vld [vmem:[%s326 + $0x6c] sm:$0x1]
        %v377 = vld [vmem:[%s326 + $0x70] sm:$0xf]
        %v378 = vld [vmem:[%s326 + $0x74] sm:$0x1]
        %v379 = vld [vmem:[%s326 + $0x78] sm:$0xf]
        %v380 = vld [vmem:[%s326 + $0x7c] sm:$0x1]
        %v381 = vld [vmem:[%s344] sm:$0xf]
        %v382 = vld [vmem:[%s344 + $0x4] sm:$0x1]
        %v391 = vunpack.c.l.b16 %v351
        %v392 = vunpack.c.l.b16 %v355
        %v393 = vunpack.c.l.b16 %v359
        %v394 = vunpack.c.l.b16 %v363
        %v395 = vunpack.c.l.b16 %v367
        %v396 = vunpack.c.l.b16 %v371
        %v397 = vunpack.c.l.b16 %v375
        %v398 = vunpack.c.l.b16 %v379
        %v399 = vpack.c.b16 %v391, %v391
        %v400 = vpack.c.b16 %v392, %v392
        %v401 = vpack.c.b16 %v393, %v393
        %v402 = vpack.c.b16 %v394, %v394
        %v403 = vpack.c.b16 %v395, %v395
        %v404 = vpack.c.b16 %v396, %v396
        %v405 = vpack.c.b16 %v397, %v397
        %v406 = vpack.c.b16 %v398, %v398
        %407 = vrot.lane.b32.xlu0 %v399, 8
        %v408 = vpop.permute.xlu0 %407
        %409 = vrot.lane.b32.xlu0 %v400, 8
        %v410 = vpop.permute.xlu0 %409
        %411 = vrot.lane.b32.xlu0 %v401, 8
        %v412 = vpop.permute.xlu0 %411
        %413 = vrot.lane.b32.xlu0 %v402, 8
        %v414 = vpop.permute.xlu0 %413
        %415 = vrot.lane.b32.xlu0 %v403, 8
        %v416 = vpop.permute.xlu0 %415
        %417 = vrot.lane.b32.xlu0 %v404, 8
        %v418 = vpop.permute.xlu0 %417
        %419 = vrot.lane.b32.xlu0 %v405, 8
        %v420 = vpop.permute.xlu0 %419
        %421 = vrot.lane.b32.xlu0 %v406, 8
        %v422 = vpop.permute.xlu0 %421
        %v431 = vunpack.c.l.b16 %v353
        %v432 = vunpack.c.l.b16 %v357
        %v433 = vunpack.c.l.b16 %v361
        %v434 = vunpack.c.l.b16 %v365
        %v435 = vunpack.c.l.b16 %v369
        %v436 = vunpack.c.l.b16 %v373
        %v437 = vunpack.c.l.b16 %v377
        %v438 = vunpack.c.l.b16 %v381
        %v439 = vpack.c.b16 %v431, %v431
        %v440 = vpack.c.b16 %v432, %v432
        %v441 = vpack.c.b16 %v433, %v433
        %v442 = vpack.c.b16 %v434, %v434
        %v443 = vpack.c.b16 %v435, %v435
        %v444 = vpack.c.b16 %v436, %v436
        %v445 = vpack.c.b16 %v437, %v437
        %v446 = vpack.c.b16 %v438, %v438
        %447 = vrot.lane.b32.xlu0 %v439, 16
        %v448 = vpop.permute.xlu0 %447
        %449 = vrot.lane.b32.xlu0 %v440, 16
        %v450 = vpop.permute.xlu0 %449
        %451 = vrot.lane.b32.xlu0 %v441, 16
        %v452 = vpop.permute.xlu0 %451
        %453 = vrot.lane.b32.xlu0 %v442, 16
        %v454 = vpop.permute.xlu0 %453
        %455 = vrot.lane.b32.xlu0 %v443, 16
        %v456 = vpop.permute.xlu0 %455
        %457 = vrot.lane.b32.xlu0 %v444, 16
        %v458 = vpop.permute.xlu0 %457
        %459 = vrot.lane.b32.xlu0 %v445, 16
        %v460 = vpop.permute.xlu0 %459
        %461 = vrot.lane.b32.xlu0 %v446, 16
        %v462 = vpop.permute.xlu0 %461
        %vm463 = vcmask 64512
        %v466 = vsel %vm463, %v349, %v408
        %v469 = vsel %vm463, %v353, %v410
        %v472 = vsel %vm463, %v357, %v412
        %v475 = vsel %vm463, %v361, %v414
        %v478 = vsel %vm463, %v365, %v416
        %v481 = vsel %vm463, %v369, %v418
        %v484 = vsel %vm463, %v373, %v420
        %v487 = vsel %vm463, %v377, %v422
        %vm488 = vcmask 130048
        %v490 = vsel %vm488, %v466, %v448
        %v492 = vsel %vm488, %v469, %v450
        %v494 = vsel %vm488, %v472, %v452
        %v496 = vsel %vm488, %v475, %v454
        %v498 = vsel %vm488, %v478, %v456
        %v500 = vsel %vm488, %v481, %v458
        %v502 = vsel %vm488, %v484, %v460
        %v504 = vsel %vm488, %v487, %v462
        %v514 = vunpack.c.l.b16 %v349
        %v515 = vunpack.c.l.b16 %v350
        %v516 = vunpack.c.l.b16 %v354
        %v517 = vunpack.c.l.b16 %v358
        %v518 = vunpack.c.l.b16 %v362
        %v519 = vunpack.c.l.b16 %v366
        %v520 = vunpack.c.l.b16 %v370
        %v521 = vunpack.c.l.b16 %v374
        %v522 = vunpack.c.l.b16 %v378
        %v523 = vpack.c.b16 %v515, %v514
        %v524 = vpack.c.b16 %v516, %v431
        %v525 = vpack.c.b16 %v517, %v432
        %v526 = vpack.c.b16 %v518, %v433
        %v527 = vpack.c.b16 %v519, %v434
        %v528 = vpack.c.b16 %v520, %v435
        %v529 = vpack.c.b16 %v521, %v436
        %v530 = vpack.c.b16 %v522, %v437
        %v539 = vunpack.c.l.b16 %v352
        %v540 = vunpack.c.l.b16 %v356
        %v541 = vunpack.c.l.b16 %v360
        %v542 = vunpack.c.l.b16 %v364
        %v543 = vunpack.c.l.b16 %v368
        %v544 = vunpack.c.l.b16 %v372
        %v545 = vunpack.c.l.b16 %v376
        %v546 = vunpack.c.l.b16 %v380
        %v547 = vpack.c.b16 %v539, %v391
        %v548 = vpack.c.b16 %v540, %v392
        %v549 = vpack.c.b16 %v541, %v393
        %v550 = vpack.c.b16 %v542, %v394
        %v551 = vpack.c.b16 %v543, %v395
        %v552 = vpack.c.b16 %v544, %v396
        %v553 = vpack.c.b16 %v545, %v397
        %v554 = vpack.c.b16 %v546, %v398
        %555 = vrot.lane.b32.xlu0 %v547, 4
        %v556 = vpop.permute.xlu0 %555
        %557 = vrot.lane.b32.xlu0 %v548, 4
        %v558 = vpop.permute.xlu0 %557
        %559 = vrot.lane.b32.xlu0 %v549, 4
        %v560 = vpop.permute.xlu0 %559
        %561 = vrot.lane.b32.xlu0 %v550, 4
        %v562 = vpop.permute.xlu0 %561
        %563 = vrot.lane.b32.xlu0 %v551, 4
        %v564 = vpop.permute.xlu0 %563
        %565 = vrot.lane.b32.xlu0 %v552, 4
        %v566 = vpop.permute.xlu0 %565
        %567 = vrot.lane.b32.xlu0 %v553, 4
        %v568 = vpop.permute.xlu0 %567
        %569 = vrot.lane.b32.xlu0 %v554, 4
        %v570 = vpop.permute.xlu0 %569
        %v572 = vunpack.c.l.b16 %v382
        %v573 = vpack.c.b16 %v572, %v438
        %574 = vrot.lane.b32.xlu0 %v524, 8
        %v575 = vpop.permute.xlu0 %574
        %576 = vrot.lane.b32.xlu0 %v525, 8
        %v577 = vpop.permute.xlu0 %576
        %578 = vrot.lane.b32.xlu0 %v526, 8
        %v579 = vpop.permute.xlu0 %578
        %580 = vrot.lane.b32.xlu0 %v527, 8
        %v581 = vpop.permute.xlu0 %580
        %582 = vrot.lane.b32.xlu0 %v528, 8
        %v583 = vpop.permute.xlu0 %582
        %584 = vrot.lane.b32.xlu0 %v529, 8
        %v585 = vpop.permute.xlu0 %584
        %586 = vrot.lane.b32.xlu0 %v530, 8
        %v587 = vpop.permute.xlu0 %586
        %588 = vrot.lane.b32.xlu0 %v573, 8
        %v589 = vpop.permute.xlu0 %588
        %vm590 = vcmask 31744
        %v593 = vsel %vm590, %v523, %v556
        %v596 = vsel %vm590, %v524, %v558
        %v599 = vsel %vm590, %v525, %v560
        %v602 = vsel %vm590, %v526, %v562
        %v605 = vsel %vm590, %v527, %v564
        %v608 = vsel %vm590, %v528, %v566
        %v611 = vsel %vm590, %v529, %v568
        %v614 = vsel %vm590, %v530, %v570
        %v616 = vsel %vm463, %v593, %v575
        %v618 = vsel %vm463, %v596, %v577
        %v620 = vsel %vm463, %v599, %v579
        %v622 = vsel %vm463, %v602, %v581
        %v624 = vsel %vm463, %v605, %v583
        %v626 = vsel %vm463, %v608, %v585
        %v628 = vsel %vm463, %v611, %v587
        %v630 = vsel %vm463, %v614, %v589
        %v639 = vunpack.c.l.b16 %v616
        %v640 = vunpack.c.h.b16 %v616
        %v641 = vunpack.c.l.b16 %v618
        %v642 = vunpack.c.h.b16 %v618
        %v643 = vunpack.c.l.b16 %v620
        %v644 = vunpack.c.h.b16 %v620
        %v645 = vunpack.c.l.b16 %v622
        %v646 = vunpack.c.h.b16 %v622
        %v647 = vunpack.c.l.b16 %v624
        %v648 = vunpack.c.h.b16 %v624
        %v649 = vunpack.c.l.b16 %v626
        %v650 = vunpack.c.h.b16 %v626
        %v651 = vunpack.c.l.b16 %v628
        %v652 = vunpack.c.h.b16 %v628
        %v653 = vunpack.c.l.b16 %v630
        %v654 = vunpack.c.h.b16 %v630
        %v655 = vpack.c.b16 %v639, %v639
        %v656 = vpack.c.b16 %v640, %v640
        %v657 = vpack.c.b16 %v641, %v641
        %v658 = vpack.c.b16 %v642, %v642
        %v659 = vpack.c.b16 %v643, %v643
        %v660 = vpack.c.b16 %v644, %v644
        %v661 = vpack.c.b16 %v645, %v645
        %v662 = vpack.c.b16 %v646, %v646
        %v663 = vpack.c.b16 %v647, %v647
        %v664 = vpack.c.b16 %v648, %v648
        %v665 = vpack.c.b16 %v649, %v649
        %v666 = vpack.c.b16 %v650, %v650
        %v667 = vpack.c.b16 %v651, %v651
        %v668 = vpack.c.b16 %v652, %v652
        %v669 = vpack.c.b16 %v653, %v653
        %v670 = vpack.c.b16 %v654, %v654
        %vm671 = vsmask.f32 3328
        %vm672 = vsmask.f32 7440
        %vm673 = vmor %vm671, %vm672
        %v675 = vshrl.u32 %v655, 16
        %v677 = vrot.slane %v675, 4
        %v678 = vshll.u32 %v655, 16
        %v680 = vrot.slane %v678, 5
        %v681 = vor.u32 %v677, %v680
        %v682 = vrot.slane %v681, 4
        %v684 = vshll.u32 %v656, 16
        %v686 = vrot.slane %v684, 5
        %v687 = vsel %vm673, %v682, %v686
        %v689 = vshrl.u32 %v657, 16
        %v691 = vrot.slane %v689, 4
        %v692 = vshll.u32 %v657, 16
        %v694 = vrot.slane %v692, 5
        %v695 = vor.u32 %v691, %v694
        %v696 = vrot.slane %v695, 4
        %v698 = vshll.u32 %v658, 16
        %v700 = vrot.slane %v698, 5
        %v701 = vsel %vm673, %v696, %v700
        %v703 = vshrl.u32 %v659, 16
        %v705 = vrot.slane %v703, 4
        %v706 = vshll.u32 %v659, 16
        %v708 = vrot.slane %v706, 5
        %v709 = vor.u32 %v705, %v708
        %v710 = vrot.slane %v709, 4
        %v712 = vshll.u32 %v660, 16
        %v714 = vrot.slane %v712, 5
        %v715 = vsel %vm673, %v710, %v714
        %v717 = vshrl.u32 %v661, 16
        %v719 = vrot.slane %v717, 4
        %v720 = vshll.u32 %v661, 16
        %v722 = vrot.slane %v720, 5
        %v723 = vor.u32 %v719, %v722
        %v724 = vrot.slane %v723, 4
        %v726 = vshll.u32 %v662, 16
        %v728 = vrot.slane %v726, 5
        %v729 = vsel %vm673, %v724, %v728
        %v731 = vshrl.u32 %v663, 16
        %v733 = vrot.slane %v731, 4
        %v734 = vshll.u32 %v663, 16
        %v736 = vrot.slane %v734, 5
        %v737 = vor.u32 %v733, %v736
        %v738 = vrot.slane %v737, 4
        %v740 = vshll.u32 %v664, 16
        %v742 = vrot.slane %v740, 5
        %v743 = vsel %vm673, %v738, %v742
        %v745 = vshrl.u32 %v665, 16
        %v747 = vrot.slane %v745, 4
        %v748 = vshll.u32 %v665, 16
        %v750 = vrot.slane %v748, 5
        %v751 = vor.u32 %v747, %v750
        %v752 = vrot.slane %v751, 4
        %v754 = vshll.u32 %v666, 16
        %v756 = vrot.slane %v754, 5
        %v757 = vsel %vm673, %v752, %v756
        %v759 = vshrl.u32 %v667, 16
        %v761 = vrot.slane %v759, 4
        %v762 = vshll.u32 %v667, 16
        %v764 = vrot.slane %v762, 5
        %v765 = vor.u32 %v761, %v764
        %v766 = vrot.slane %v765, 4
        %v768 = vshll.u32 %v668, 16
        %v770 = vrot.slane %v768, 5
        %v771 = vsel %vm673, %v766, %v770
        %v773 = vshrl.u32 %v669, 16
        %v775 = vrot.slane %v773, 4
        %v776 = vshll.u32 %v669, 16
        %v778 = vrot.slane %v776, 5
        %v779 = vor.u32 %v775, %v778
        %v780 = vrot.slane %v779, 4
        %v782 = vshll.u32 %v670, 16
        %v784 = vrot.slane %v782, 5
        %v785 = vsel %vm673, %v780, %v784
        %v786 = vld [vmem:[%s2] sm:$0xf]
        %v787 = vld [vmem:[%s2 + $0x4] sm:$0xf]
        %v788 = vld [vmem:[%s2 + $0x8] sm:$0xf]
        %v789 = vld [vmem:[%s3] sm:$0xf]
        %v790 = vld [vmem:[%s3 + $0x4] sm:$0x3]
        %v791 = vunpack.c.l.b16 %v687
        %v792 = vunpack.c.l.b16 %v701
        %v793 = vunpack.c.l.b16 %v715
        %v794 = vunpack.c.l.b16 %v729
        %v795 = vunpack.c.l.b16 %v743
        %v796 = vunpack.c.l.b16 %v757
        %v797 = vunpack.c.l.b16 %v771
        %v798 = vunpack.c.l.b16 %v785
        %v799 = vpack.c.b16 %v792, %v791
        %v800 = vpack.c.b16 %v794, %v793
        %v801 = vpack.c.b16 %v796, %v795
        %v802 = vpack.c.b16 %v798, %v797
        %v805 = vunpack.c.l.b16 %v789
        %v806 = vunpack.c.l.b16 %v790
        %v807 = vpack.c.b16 %v806, %v805
        %vm808 = vcmask 97280
        %v810 = vsel %vm808, %v799, 0
        %v813 = vsel %vm808, %v800, 0
        %v816 = vsel %vm808, %v801, 0
        %v819 = vsel %vm808, %v802, 0
        %vm821 = vcmask 1045504
        %v823 = vsel %vm821, %v807, 0
        %825 = vmatprep.subr.bf16.mxu0 0
        %826 = vmatpush1.bf16.msra.mxu0 %v823
        %827 = vmatprep.subr.bf16.mxu0 0
        %828 = vmatpush1.bf16.msra.mxu0 0
        %829 = vmatprep.subr.bf16.mxu0 0
        %830 = vmatpush1.bf16.msra.mxu0 0
        %831 = vmatprep.subr.bf16.mxu0 0
        %832 = vmatpush1.bf16.msra.mxu0 0
        %833 = vmatprep.subr.bf16.mxu0 0
        %834 = vmatpush1.bf16.msra.mxu0 0
        %835 = vmatprep.subr.bf16.mxu0 0
        %836 = vmatpush1.bf16.msra.mxu0 0
        %837 = vmatprep.subr.bf16.mxu0 0
        %838 = vmatpush1.bf16.msra.mxu0 0
        %839 = vmatprep.subr.bf16.mxu0 0
        %840 = vmatpush1.bf16.msra.mxu0 0
        %841 = vmatprep.subr.bf16.mxu0 0
        %842 = vmatpush1.bf16.msra.mxu0 0
        %843 = vmatprep.subr.bf16.mxu0 0
        %844 = vmatpush1.bf16.msra.mxu0 0
        %845 = vmatprep.subr.bf16.mxu0 0
        %846 = vmatpush1.bf16.msra.mxu0 0
        %847 = vmatprep.subr.bf16.mxu0 0
        %848 = vmatpush1.bf16.msra.mxu0 0
        %849 = vmatprep.subr.bf16.mxu0 0
        %850 = vmatpush1.bf16.msra.mxu0 0
        %851 = vmatprep.subr.bf16.mxu0 0
        %852 = vmatpush1.bf16.msra.mxu0 0
        %853 = vmatprep.subr.bf16.mxu0 0
        %854 = vmatpush1.bf16.msra.mxu0 0
        %855 = vmatprep.subr.bf16.mxu0 0
        %856 = vmatpush1.bf16.msra.mxu0 0
        %857 = vmatprep.mubr.bf16.mxu0 0
        %858 = vmatmul.mubr.bf16.gmra.mrb[0].mxu0 %v810
        %v859 = vpop.f32.mrb[0].mxu0
        %v860 = vadd.f32 0.0, %v859
        %v861 = vpop.f32.mrb[0].mxu0
        %v862 = vpop.f32.mrb[0].mxu0
        %v863 = vadd.f32 0.0, %v862
        %v864 = vpop.f32.mrb[0].mxu0
        %865 = vmatprep.mubr.bf16.mxu0 0
        %866 = vmatmul.mubr.bf16.gmra.mrb[0].mxu0 %v813
        %v867 = vpop.f32.mrb[0].mxu0
        %v868 = vadd.f32 0.0, %v867
        %v869 = vpop.f32.mrb[0].mxu0
        %v870 = vpop.f32.mrb[0].mxu0
        %v871 = vadd.f32 0.0, %v870
        %v872 = vpop.f32.mrb[0].mxu0
        %873 = vmatprep.mubr.bf16.mxu0 0
        %874 = vmatmul.mubr.bf16.gmra.mrb[0].mxu0 %v816
        %v875 = vpop.f32.mrb[0].mxu0
        %v876 = vadd.f32 0.0, %v875
        %v877 = vpop.f32.mrb[0].mxu0
        %v878 = vpop.f32.mrb[0].mxu0
        %v879 = vadd.f32 0.0, %v878
        %v880 = vpop.f32.mrb[0].mxu0
        %881 = vmatprep.mubr.bf16.mxu0 0
        %882 = vmatmul.mubr.bf16.gmra.mrb[0].mxu0 %v819
        %v883 = vpop.f32.mrb[0].mxu0
        %v884 = vadd.f32 0.0, %v883
        %v885 = vpop.f32.mrb[0].mxu0
        %v886 = vpop.f32.mrb[0].mxu0
        %v887 = vadd.f32 0.0, %v886
        %v888 = vpop.f32.mrb[0].mxu0
        %889 = vdwg.mxu0
        %v898 = vunpack.c.l.b16 %v490
        %v899 = vunpack.c.l.b16 %v492
        %v900 = vunpack.c.l.b16 %v494
        %v901 = vunpack.c.l.b16 %v496
        %v902 = vunpack.c.l.b16 %v498
        %v903 = vunpack.c.l.b16 %v500
        %v904 = vunpack.c.l.b16 %v502
        %v905 = vunpack.c.l.b16 %v504
        %v906 = vpack.c.b16 %v899, %v898
        %v907 = vpack.c.b16 %v901, %v900
        %v908 = vpack.c.b16 %v903, %v902
        %v909 = vpack.c.b16 %v905, %v904
        %v913 = vunpack.c.l.b16 %v786
        %v914 = vunpack.c.l.b16 %v787
        %v915 = vunpack.c.l.b16 %v788
        %v916 = vpack.c.b16 %v914, %v913
        %v917 = vpack.c.b16 %v915, %v915
        %vm919 = vcmask 195584
        %v921 = vsel %vm919, %v906, 0
        %v924 = vsel %vm919, %v907, 0
        %v927 = vsel %vm919, %v908, 0
        %v930 = vsel %vm919, %v909, 0
        %vm932 = vcmask 1043456
        %v934 = vsel %vm932, %v917, 0
        %936 = vmatprep.subr.bf16.mxu0 0
        %937 = vmatpush1.bf16.msra.mxu0 %v916
        %938 = vmatprep.subr.bf16.mxu0 0
        %939 = vmatpush1.bf16.msra.mxu0 %v934
        %940 = vmatprep.subr.bf16.mxu0 0
        %941 = vmatpush1.bf16.msra.mxu0 0
        %942 = vmatprep.subr.bf16.mxu0 0
        %943 = vmatpush1.bf16.msra.mxu0 0
        %944 = vmatprep.subr.bf16.mxu0 0
        %945 = vmatpush1.bf16.msra.mxu0 0
        %946 = vmatprep.subr.bf16.mxu0 0
        %947 = vmatpush1.bf16.msra.mxu0 0
        %948 = vmatprep.subr.bf16.mxu0 0
        %949 = vmatpush1.bf16.msra.mxu0 0
        %950 = vmatprep.subr.bf16.mxu0 0
        %951 = vmatpush1.bf16.msra.mxu0 0
        %952 = vmatprep.subr.bf16.mxu0 0
        %953 = vmatpush1.bf16.msra.mxu0 0
        %954 = vmatprep.subr.bf16.mxu0 0
        %955 = vmatpush1.bf16.msra.mxu0 0
        %956 = vmatprep.subr.bf16.mxu0 0
        %957 = vmatpush1.bf16.msra.mxu0 0
        %958 = vmatprep.subr.bf16.mxu0 0
        %959 = vmatpush1.bf16.msra.mxu0 0
        %960 = vmatprep.subr.bf16.mxu0 0
        %961 = vmatpush1.bf16.msra.mxu0 0
        %962 = vmatprep.subr.bf16.mxu0 0
        %963 = vmatpush1.bf16.msra.mxu0 0
        %964 = vmatprep.subr.bf16.mxu0 0
        %965 = vmatpush1.bf16.msra.mxu0 0
        %966 = vmatprep.subr.bf16.mxu0 0
        %967 = vmatpush1.bf16.msra.mxu0 0
        %968 = vmatprep.mubr.bf16.mxu0 0
        %969 = vmatmul.mubr.bf16.gmra.mrb[0].mxu0 %v921
        %v970 = vpop.f32.mrb[0].mxu0
        %v971 = vadd.f32 %v860, %v970
        %v972 = vpop.f32.mrb[0].mxu0
        %v973 = vpop.f32.mrb[0].mxu0
        %v974 = vadd.f32 %v863, %v973
        %v975 = vpop.f32.mrb[0].mxu0
        %976 = vmatprep.mubr.bf16.mxu0 0
        %977 = vmatmul.mubr.bf16.gmra.mrb[0].mxu0 %v924
        %v978 = vpop.f32.mrb[0].mxu0
        %v979 = vadd.f32 %v868, %v978
        %v980 = vpop.f32.mrb[0].mxu0
        %v981 = vpop.f32.mrb[0].mxu0
        %v982 = vadd.f32 %v871, %v981
        %v983 = vpop.f32.mrb[0].mxu0
        %984 = vmatprep.mubr.bf16.mxu0 0
        %985 = vmatmul.mubr.bf16.gmra.mrb[0].mxu0 %v927
        %v986 = vpop.f32.mrb[0].mxu0
        %v987 = vadd.f32 %v876, %v986
        %v988 = vpop.f32.mrb[0].mxu0
        %v989 = vpop.f32.mrb[0].mxu0
        %v990 = vadd.f32 %v879, %v989
        %v991 = vpop.f32.mrb[0].mxu0
        %992 = vmatprep.mubr.bf16.mxu0 0
        %993 = vmatmul.mubr.bf16.gmra.mrb[0].mxu0 %v930
        %v994 = vpop.f32.mrb[0].mxu0
        %v995 = vadd.f32 %v884, %v994
        %v996 = vpop.f32.mrb[0].mxu0
        %v997 = vpop.f32.mrb[0].mxu0
        %v998 = vadd.f32 %v887, %v997
        %v999 = vpop.f32.mrb[0].mxu0
        %1000 = vdwg.mxu0
        %v1001 = vpack.c.bf16 %v974, %v971
        %v1002 = vpack.c.bf16 %v982, %v979
        %v1003 = vpack.c.bf16 %v990, %v987
        %v1004 = vpack.c.bf16 %v998, %v995
        %v1009 = vunpack.c.l.b16 %v1001
        %v1010 = vunpack.c.h.b16 %v1001
        %v1011 = vunpack.c.l.b16 %v1002
        %v1012 = vunpack.c.h.b16 %v1002
        %v1013 = vunpack.c.l.b16 %v1003
        %v1014 = vunpack.c.h.b16 %v1003
        %v1015 = vunpack.c.l.b16 %v1004
        %v1016 = vunpack.c.h.b16 %v1004
        %v1017 = vpack.c.b16 %v1009, %v1009
        %v1018 = vpack.c.b16 %v1010, %v1010
        %v1019 = vpack.c.b16 %v1011, %v1011
        %v1020 = vpack.c.b16 %v1012, %v1012
        %v1021 = vpack.c.b16 %v1013, %v1013
        %v1022 = vpack.c.b16 %v1014, %v1014
        %v1023 = vpack.c.b16 %v1015, %v1015
        %v1024 = vpack.c.b16 %v1016, %v1016
        %1033 = vst [vmem:[%s303] sm:$0xf] %v1017
        %1034 = vst [vmem:[%s303 + $0x4] sm:$0xf] %v1018
        %1035 = vst [vmem:[%s303 + $0x8] sm:$0xf] %v1019
        %1036 = vst [vmem:[%s303 + $0xc] sm:$0xf] %v1020
        %1037 = vst [vmem:[%s303 + $0x10] sm:$0xf] %v1021
        %1038 = vst [vmem:[%s303 + $0x14] sm:$0xf] %v1022
        %1039 = vst [vmem:[%s303 + $0x18] sm:$0xf] %v1023
        %1040 = vst [vmem:[%s303 + $0x1c] sm:$0xf] %v1024
        %v1041 = vadd.f32 %v971, %v974
        %v1042 = vadd.f32 %v1041, %v979
        %v1043 = vadd.f32 %v1042, %v982
        %v1044 = vadd.f32 %v1043, %v987
        %v1045 = vadd.f32 %v1044, %v990
        %v1046 = vadd.f32 %v1045, %v995
        %v1047 = vadd.f32 %v1046, %v998
        %v1048 = vrot.slane %v1047, 4
        %v1049 = vadd.f32 %v1047, %v1048
        %v1050 = vrot.slane %v1049, 2
        %v1051 = vadd.f32 %v1049, %v1050
        %v1052 = vrot.slane %v1051, 1
        %v1053 = vadd.f32 %v1051, %v1052
        %v1054 = vmul.f32 %v971, %v971
        %v1055 = vmul.f32 %v974, %v974
        %v1056 = vmul.f32 %v979, %v979
        %v1057 = vmul.f32 %v982, %v982
        %v1058 = vmul.f32 %v987, %v987
        %v1059 = vmul.f32 %v990, %v990
        %v1060 = vmul.f32 %v995, %v995
        %v1061 = vmul.f32 %v998, %v998
        %v1062 = vadd.f32 %v1054, %v1055
        %v1063 = vadd.f32 %v1062, %v1056
        %v1064 = vadd.f32 %v1063, %v1057
        %v1065 = vadd.f32 %v1064, %v1058
        %v1066 = vadd.f32 %v1065, %v1059
        %v1067 = vadd.f32 %v1066, %v1060
        %v1068 = vadd.f32 %v1067, %v1061
        %v1069 = vrot.slane %v1068, 4
        %v1070 = vadd.f32 %v1068, %v1069
        %v1071 = vrot.slane %v1070, 2
        %v1072 = vadd.f32 %v1070, %v1071
        %v1073 = vrot.slane %v1072, 1
        %v1074 = vadd.f32 %v1072, %v1073
        %vm1075 = vcmask 1040384
        %v1076 = vsel %vm1075, %v1053, %v1074
        %1077 = vst [vmem:[%s310] sm:$0x3] %v1076
        %s1078 = sand.u32 %s147, 1
        %s1079 = scalar_lea.sflag [#allocation3], %s1078
        %s1080 = sand.u32 %s147, 1
        %s1081 = smul.addr %s1080, 32
        %s1082 = scalar_lea.vmem [#allocation2], %s1081
        %s1083 = sand.u32 %s175, 1
        %s1084 = scalar_lea.sflag [#allocation5], %s1083
        %s1085 = sand.u32 %s175, 1
        %s1086 = smul.addr %s1085, 2
        %s1087 = scalar_lea.vmem [#allocation4], %s1086
        // Predicated region
        $region37: #{tpu_custom_call.1} parent=35 // pred_check
          %p1088 = pneg %p157
        $region38: #{tpu_custom_call.1} parent=35 // pred_check_branch
          %1090 = sbr.rel (%p1088) target = $region40
        $region39: #{tpu_custom_call.1} parent=35 // pred_region
          %s1091 = smul.u32 8, %s28
          %s1093 = ssub.s32 512, 512
          %1094 = vsyncadd %s1079, %s1093
          %s1095 = smul.addr %s27, 8
          %s1096 = sadd.s32 %s1091, %s1095
          %s1097 = smul.addr %s1096, 64
          %s1098 = scalar_lea.hbm %s4, %s1097
          %s1099 = sshll.u32 %s1082, 4
          %s1100 = int_to_ptr.vmem [resolvable:$true] %s1099
          %1105 = dma.vmem_to_hbm [thread:$0]  %s1100, 512, %s1098, %s1079, 64, 64, 4
        $region40: #{tpu_custom_call.1} parent=35 // pred_fallthru
          _
        // Predicated region
        $region41: #{tpu_custom_call.1} parent=35 // pred_check
          %p1106 = pneg %p185
        $region42: #{tpu_custom_call.1} parent=35 // pred_check_branch
          %1108 = sbr.rel (%p1106) target = $region44
        $region43: #{tpu_custom_call.1} parent=35 // pred_region
          %s1110 = ssub.s32 32, 32
          %1111 = vsyncadd %s1084, %s1110
          %s1112 = sadd.s32 %s28, %s27
          %s1113 = smul.addr %s1112, 32
          %s1114 = scalar_lea.hbm %s5, %s1113
          %s1116 = sshll.u32 %s1087, 4
          %s1117 = int_to_ptr.vmem [resolvable:$true] %s1116
          %1119 = dma.vmem_to_hbm [thread:$0]  %s1117, 32, %s1114, %s1084
        $region44: #{tpu_custom_call.1} parent=35 // pred_fallthru
          _
      $region36: #{tpu_custom_call.1} parent=5 // pred_fallthru
        _
      %p1120 = scmp.le.s32.totalorder 2, %s18
      // Predicated region
      $region45: #{tpu_custom_call.1} parent=5 // pred_check
        %p1121 = pneg %p1120
      $region46: #{tpu_custom_call.1} parent=5 // pred_check_branch
        %1123 = sbr.rel (%p1121) target = $region48
      $region47: #{tpu_custom_call.1} parent=5 // pred_region
        %s1124 = ssub.s32 %s18, 2
        // Predicated region
        $region49: #{tpu_custom_call.1} parent=47 // pred_check
          %p1125 = pneg %p163
        $region50: #{tpu_custom_call.1} parent=47 // pred_check_branch
          %1127 = sbr.rel (%p1125) target = $region52
        $region51: #{tpu_custom_call.1} parent=47 // pred_region
          %s1128 = sand.u32 %s148, 1
          %s1129 = scalar_lea.sflag [#allocation3], %s1128
          %s1130 = sand.u32 %s148, 1
          %s1131 = smul.addr %s1130, 32
          %s1132 = scalar_lea.vmem [#allocation2], %s1131
          %1133 = dma.done %s1129, 512
        $region52: #{tpu_custom_call.1} parent=47 // pred_fallthru
          _
        // Predicated region
        $region53: #{tpu_custom_call.1} parent=47 // pred_check
          %p1134 = pneg %p191
        $region54: #{tpu_custom_call.1} parent=47 // pred_check_branch
          %1136 = sbr.rel (%p1134) target = $region56
        $region55: #{tpu_custom_call.1} parent=47 // pred_region
          %s1137 = sand.u32 %s176, 1
          %s1138 = scalar_lea.sflag [#allocation5], %s1137
          %s1139 = sand.u32 %s176, 1
          %s1140 = smul.addr %s1139, 2
          %s1141 = scalar_lea.vmem [#allocation4], %s1140
          %1142 = dma.done %s1138, 32
        $region56: #{tpu_custom_call.1} parent=47 // pred_fallthru
          _
      $region48: #{tpu_custom_call.1} parent=5 // pred_fallthru
        _
    $region6: #{tpu_custom_call.1} parent=1 // loop_footer
      %s22 = sadd.s32 1, %s18
    $region7: #{tpu_custom_call.1} parent=1 // loop_footer_branch
      %17 = sbr.rel target = $region3
    $region8: #{tpu_custom_call.1} parent=1 // loop_exit
      _
    %1143 = vsyncpa [#allocation3], 1
    %s1144 = scalar_lea.sflag [#allocation3], 1
    %1145 = vsyncpa %s1144, 1
    %1146 = vsyncpa [#allocation5], 1
    %s1147 = scalar_lea.sflag [#allocation5], 1
    %1148 = vsyncpa %s1147, 1

</llo_original>
